<compile_context>
chip_gen: v5e
topology: v5e:2x2
jax: 0.10.0
libtpu: 0.0.40
codegen_flags: <defaults>
</compile_context>

<pallas_src>
import functools

import jax
import jax.numpy as jnp
from jax.experimental import pallas as pl
from jax.experimental.pallas import tpu as pltpu


_LANE = 128     # lane width: last dim of every block kept a multiple of this
_SUBLANE = 8    # f32 sublane width: second-to-last dim kept a multiple of this


def _round_up(x, m):
    return ((x + m - 1) // m) * m


def _tpu_vmem_capacity_bytes():
    """Best-effort per-core VMEM capacity; conservative 64 MiB if unknown."""
    try:
        cap = getattr(pltpu.get_tpu_info(), "vmem_capacity_bytes", None)
        if cap:
            return int(cap)
    except Exception:
        pass
    return 64 * 1024 * 1024


def _mlp_kernel(num_layers, x_ref, *refs):
    """refs = (w0, b0, w1, b1, ..., w_{L-1}, b_{L-1}, out_ref).

    All feature dims are already padded to multiples of 128 by the wrapper.
    NOTE: padding correctness relies on ReLU(0)=0 and zero-padded biases.
    """
    out_ref = refs[-1]
    wb = refs[:-1]
    h = x_ref[...]                                  # native/compute dtype -> MXU operand
    for i in range(num_layers):
        w = wb[2 * i][...]
        b = wb[2 * i + 1][...]
        acc = jnp.dot(h, w, preferred_element_type=jnp.float32)   # f32 accumulate
        acc = acc + b.astype(jnp.float32)                         # f32 epilogue
        if i < num_layers - 1:
            acc = jnp.maximum(acc, 0.0)                           # ReLU (f32)
            h = acc.astype(h.dtype)                               # back to operand dtype
        else:
            out_ref[...] = acc.astype(out_ref.dtype)              # lane-dense 128-wide store


def mlp_pallas(x, weights, biases, *, block_m=None, compute_dtype=None,
               single_buffer_weights=True):
    """x: [M, input_dim]; weights[i]: [in_i, out_i] (pre-transposed); biases[i]: [out_i].

    compute_dtype: optionally jnp.bfloat16 to feed the MXU (and HBM streams) in
    bf16 while keeping f32 accumulation + epilogue.  Default keeps x's dtype.
    """
    num_layers = len(weights)
    assert num_layers >= 1 and len(biases) == num_layers
    M, in_dim = x.shape
    out_dim = weights[-1].shape[1]
    out_dtype = x.dtype
    out_itemsize = jnp.dtype(out_dtype).itemsize
    op_dtype = jnp.dtype(compute_dtype) if compute_dtype is not None else jnp.dtype(x.dtype)
    op_itemsize = op_dtype.itemsize
    user_block_m = block_m is not None

    # ---- Zero-pad all feature dims to multiples of 128 (lane-dense, full MXU tiles).
    in_pads = [_round_up(w.shape[0], _LANE) for w in weights]
    out_pads = [_round_up(w.shape[1], _LANE) for w in weights]
    din_pad, dout_pad = in_pads[0], out_pads[-1]

    x_p = jnp.pad(x.astype(op_dtype), ((0, 0), (0, din_pad - in_dim)))
    w_ps, b_ps = [], []
    for w, b, ip, op_ in zip(weights, biases, in_pads, out_pads):
        w_ps.append(jnp.pad(w.astype(op_dtype),
                            ((0, ip - w.shape[0]), (0, op_ - w.shape[1]))))
        b_ps.append(jnp.pad(b.astype(jnp.float32), (0, op_ - b.shape[0])).reshape(1, op_))

    # ---- Generation-aware VMEM budget / pipeline depth.
    vmem_cap = _tpu_vmem_capacity_bytes()
    is_small_vmem = vmem_cap <= 80 * 1024 * 1024           # v7x-class (64 MiB per TC)
    vmem_budget = (40 if is_small_vmem else 80) * 1024 * 1024
    io_buffers = 3 if is_small_vmem else 2                 # deeper x/out pipeline on v7x

    wgt_bytes_1x = sum(wp.nbytes + bp.nbytes for wp, bp in zip(w_ps, b_ps))
    max_feat = max([din_pad] + out_pads)

    def est_vmem(bm, weights_single_buffered):
        io = io_buffers * bm * (din_pad * op_itemsize + dout_pad * out_itemsize)
        act = bm * max_feat * (4 + op_itemsize)             # one f32 acc + one operand act
        wgt = wgt_bytes_1x * (1 if weights_single_buffered else 2)
        return io + act + wgt

    # ---- M tiling: large default tile (amortize ~0.35us/step), multiple of 8.
    m8 = _round_up(M, _SUBLANE)
    if block_m is None:
        block_m = 2048
    block_m = max(_SUBLANE, _round_up(min(block_m, m8), _SUBLANE))

    # On v7x (2 TensorCores) make sure mid/large M yields >= 2 grid steps so the
    # "parallel" axis actually gives both cores work (unless caller fixed block_m).
    if is_small_vmem and not user_block_m and m8 >= 512:
        block_m = min(block_m, _round_up(pl.cdiv(m8, 2), _SUBLANE))

    # Shrink only if the VMEM budget is exceeded.
    while block_m > _SUBLANE and est_vmem(block_m, single_buffer_weights) > vmem_budget:
        block_m = max(_SUBLANE, _round_up(block_m // 2, _SUBLANE))

    m_pad = _round_up(M, block_m)
    if m_pad != M:
        x_p = jnp.pad(x_p, ((0, m_pad - M), (0, 0)))
    grid = (m_pad // block_m,)

    # Advisory cost estimate (true flops; HBM bytes of the padded streams).
    cost = pl.CostEstimate(
        flops=2 * M * sum(w.shape[0] * w.shape[1] for w in weights),
        transcendentals=0,
        bytes_accessed=int(m_pad * din_pad * op_itemsize + wgt_bytes_1x
                           + m_pad * dout_pad * out_itemsize),
    )
    vmem_limit = int(min(vmem_cap,
                         max(2 * est_vmem(block_m, single_buffer_weights),
                             32 * 1024 * 1024)))

    def build(use_pipeline_modes):
        wb_inputs, wb_specs = [], []
        for wp, bp in zip(w_ps, b_ps):
            kw = {}
            if use_pipeline_modes and single_buffer_weights:
                # Weights never change across grid steps -> single-buffer them.
                kw["pipeline_mode"] = pl.Buffered(1)
            wb_inputs.append(wp)
            wb_specs.append(pl.BlockSpec(wp.shape, lambda i: (0, 0), **kw))
            wb_inputs.append(bp)
            wb_specs.append(pl.BlockSpec(bp.shape, lambda i: (0, 0), **kw))

        io_kw = {}
        if use_pipeline_modes and io_buffers != 2:
            io_kw["pipeline_mode"] = pl.Buffered(io_buffers)
        x_spec = pl.BlockSpec((block_m, din_pad), lambda i: (i, 0), **io_kw)
        o_spec = pl.BlockSpec((block_m, dout_pad), lambda i: (i, 0), **io_kw)

        call = pl.pallas_call(
            functools.partial(_mlp_kernel, num_layers),
            out_shape=jax.ShapeDtypeStruct((m_pad, dout_pad), out_dtype),
            grid_spec=pltpu.PrefetchScalarGridSpec(
                num_scalar_prefetch=0,
                grid=grid,
                in_specs=[x_spec] + wb_specs,
                out_specs=o_spec,
            ),
            compiler_params=pltpu.CompilerParams(
                dimension_semantics=("parallel",),   # shards M tiles across v7x's 2 TCs
                vmem_limit_bytes=vmem_limit,
            ),
            cost_estimate=cost,
        )
        return call, wb_inputs

    want_pipeline_modes = single_buffer_weights or io_buffers != 2
    # Narrow fallback: only unsupported pipeline_mode / lowering rejections retry
    # without pipeline modes; anything else propagates.
    fallback_errors = (TypeError, ValueError, NotImplementedError, pltpu.LoweringException)
    if want_pipeline_modes:
        try:
            call, wb_inputs = build(True)
            padded_out = call(x_p, *wb_inputs)
        except fallback_errors:
            call, wb_inputs = build(False)
            padded_out = call(x_p, *wb_inputs)
    else:
        call, wb_inputs = build(False)
        padded_out = call(x_p, *wb_inputs)

    # Slice the zero-padded rows/lanes off in plain JAX (outside the kernel).
    # TODO(synk): for very large M one could also emit the padded output in bf16
    # to halve the (mostly-zero) writeback stream; kept f32-exact here.
    return padded_out[:M, :out_dim]


def init_mlp_params(key, input_dim, hidden_dim, output_dim, num_layers):
    """Deterministic init matching nn.Linear default U(-1/sqrt(fan_in), +).

    Weights are returned already transposed to [in, out]."""
    h = [hidden_dim] * (num_layers - 1)
    in_dims = [input_dim] + h
    out_dims = h + [output_dim]
    weights, biases = [], []
    for n_in, n_out in zip(in_dims, out_dims):
        key, kw, kb = jax.random.split(key, 3)
        bound = 1.0 / (n_in ** 0.5)
        weights.append(jax.random.uniform(kw, (n_in, n_out), jnp.float32, -bound, bound))
        biases.append(jax.random.uniform(kb, (n_out,), jnp.float32, -bound, bound))
    return weights, biases


def mlp_reference(x, weights, biases):
    h = x
    n = len(weights)
    for i, (w, b) in enumerate(zip(weights, biases)):
        h = h @ w + b
        if i < n - 1:
            h = jnp.maximum(h, 0.0)
    return h


if __name__ == "__main__":
    # Shapes consistent with TransVG's bbox-embed MLP
    # (input_dim=hidden_dim, output_dim=4, num_layers=3), scaled down.
    input_dim, hidden_dim, output_dim, num_layers = 32, 32, 4, 3
    batch = 8

    key = jax.random.PRNGKey(0)
    key, kx = jax.random.split(key)
    x = jax.random.normal(kx, (batch, input_dim), jnp.float32)
    weights, biases = init_mlp_params(key, input_dim, hidden_dim, output_dim, num_layers)

    out = jax.block_until_ready(mlp_pallas(x, weights, biases))
    ref = mlp_reference(x, weights, biases)
    assert out.shape == (batch, output_dim)
    assert jnp.allclose(out, ref, atol=1e-5, rtol=1e-5), "mismatch vs reference (small)"

    # Second check: ragged M with an explicit tile -> multi-step grid + row padding path.
    key, kx2 = jax.random.split(key)
    x2 = jax.random.normal(kx2, (300, input_dim), jnp.float32)
    out2 = jax.block_until_ready(mlp_pallas(x2, weights, biases, block_m=128))
    ref2 = mlp_reference(x2, weights, biases)
    assert out2.shape == (300, output_dim)
    assert jnp.allclose(out2, ref2, atol=1e-5, rtol=1e-5), "mismatch vs reference (tiled)"

    print("KERNEL_OK")
</pallas_src>

<mosaic_0001>
module attributes {stable_mosaic.version = 11 : i64} {
  func.func @_mlp_kernel(%arg0: i32, %arg1: memref<8x128xf32, #tpu.memory_space<vmem>>, %arg2: memref<128x128xf32, #tpu.memory_space<vmem>>, %arg3: memref<1x128xf32, #tpu.memory_space<vmem>>, %arg4: memref<128x128xf32, #tpu.memory_space<vmem>>, %arg5: memref<1x128xf32, #tpu.memory_space<vmem>>, %arg6: memref<128x128xf32, #tpu.memory_space<vmem>>, %arg7: memref<1x128xf32, #tpu.memory_space<vmem>>, %arg8: memref<8x128xf32, #tpu.memory_space<vmem>>) attributes {dimension_semantics = [#tpu.dimension_semantics<parallel>], iteration_bounds = array<i64: 1>, scalar_prefetch = 0 : i64, scratch_operands = 0 : i64, tpu.core_type = #tpu.core_type<tc>, window_params = [{transform_indices = @transform_0, window_bounds = array<i64: 8, 128>}, {pipeline_mode = #tpu.pipeline_mode<synchronous>, transform_indices = @transform_1, window_bounds = array<i64: 128, 128>}, {pipeline_mode = #tpu.pipeline_mode<synchronous>, transform_indices = @transform_2, window_bounds = array<i64: 1, 128>}, {pipeline_mode = #tpu.pipeline_mode<synchronous>, transform_indices = @transform_3, window_bounds = array<i64: 128, 128>}, {pipeline_mode = #tpu.pipeline_mode<synchronous>, transform_indices = @transform_4, window_bounds = array<i64: 1, 128>}, {pipeline_mode = #tpu.pipeline_mode<synchronous>, transform_indices = @transform_5, window_bounds = array<i64: 128, 128>}, {pipeline_mode = #tpu.pipeline_mode<synchronous>, transform_indices = @transform_6, window_bounds = array<i64: 1, 128>}, {transform_indices = @transform_7, window_bounds = array<i64: 8, 128>}]} {
    %c0 = arith.constant 0 : index
    %c0_0 = arith.constant 0 : index
    %0 = vector.load %arg1[%c0, %c0_0] : memref<8x128xf32, #tpu.memory_space<vmem>>, vector<8x128xf32>
    %c0_1 = arith.constant 0 : index
    %c0_2 = arith.constant 0 : index
    %1 = vector.load %arg2[%c0_1, %c0_2] : memref<128x128xf32, #tpu.memory_space<vmem>>, vector<128x128xf32>
    %c0_3 = arith.constant 0 : index
    %c0_4 = arith.constant 0 : index
    %2 = vector.load %arg3[%c0_3, %c0_4] : memref<1x128xf32, #tpu.memory_space<vmem>>, vector<1x128xf32>
    %cst = arith.constant dense<0.000000e+00> : vector<8x128xf32>
    %3 = tpu.matmul %0, %1, %cst {dimension_numbers = #tpu.dot_dimension_numbers<[1], [0], [0], [1], [0, 0, 1, 1], [], []>} : vector<8x128xf32>, vector<128x128xf32>, vector<8x128xf32> -> vector<8x128xf32>
    %4 = vector.broadcast %2 : vector<1x128xf32> to vector<8x128xf32>
    %5 = arith.addf %3, %4 : vector<8x128xf32>
    %cst_5 = arith.constant 0.000000e+00 : f32
    %6 = vector.broadcast %cst_5 : f32 to vector<8x128xf32>
    %7 = arith.maximumf %5, %6 : vector<8x128xf32>
    %c0_6 = arith.constant 0 : index
    %c0_7 = arith.constant 0 : index
    %8 = vector.load %arg4[%c0_6, %c0_7] : memref<128x128xf32, #tpu.memory_space<vmem>>, vector<128x128xf32>
    %c0_8 = arith.constant 0 : index
    %c0_9 = arith.constant 0 : index
    %9 = vector.load %arg5[%c0_8, %c0_9] : memref<1x128xf32, #tpu.memory_space<vmem>>, vector<1x128xf32>
    %cst_10 = arith.constant dense<0.000000e+00> : vector<8x128xf32>
    %10 = tpu.matmul %7, %8, %cst_10 {dimension_numbers = #tpu.dot_dimension_numbers<[1], [0], [0], [1], [0, 0, 1, 1], [], []>} : vector<8x128xf32>, vector<128x128xf32>, vector<8x128xf32> -> vector<8x128xf32>
    %11 = vector.broadcast %9 : vector<1x128xf32> to vector<8x128xf32>
    %12 = arith.addf %10, %11 : vector<8x128xf32>
    %cst_11 = arith.constant 0.000000e+00 : f32
    %13 = vector.broadcast %cst_11 : f32 to vector<8x128xf32>
    %14 = arith.maximumf %12, %13 : vector<8x128xf32>
    %c0_12 = arith.constant 0 : index
    %c0_13 = arith.constant 0 : index
    %15 = vector.load %arg6[%c0_12, %c0_13] : memref<128x128xf32, #tpu.memory_space<vmem>>, vector<128x128xf32>
    %c0_14 = arith.constant 0 : index
    %c0_15 = arith.constant 0 : index
    %16 = vector.load %arg7[%c0_14, %c0_15] : memref<1x128xf32, #tpu.memory_space<vmem>>, vector<1x128xf32>
    %cst_16 = arith.constant dense<0.000000e+00> : vector<8x128xf32>
    %17 = tpu.matmul %14, %15, %cst_16 {dimension_numbers = #tpu.dot_dimension_numbers<[1], [0], [0], [1], [0, 0, 1, 1], [], []>} : vector<8x128xf32>, vector<128x128xf32>, vector<8x128xf32> -> vector<8x128xf32>
    %18 = vector.broadcast %16 : vector<1x128xf32> to vector<8x128xf32>
    %19 = arith.addf %17, %18 : vector<8x128xf32>
    %c0_17 = arith.constant 0 : index
    %c0_18 = arith.constant 0 : index
    %20 = vector.load %arg8[%c0_17, %c0_18] : memref<8x128xf32, #tpu.memory_space<vmem>>, vector<8x128xf32>
    tpu.vector_store %arg8[%c0_17, %c0_18], %19 {strides = array<i32>} : memref<8x128xf32, #tpu.memory_space<vmem>>, vector<8x128xf32>,
    return
  }
  func.func @transform_0(%arg0: i32) -> (i32, i32) {
    %c0_i32 = arith.constant 0 : i32
    %c0_i32_0 = arith.constant 0 : i32
    return %arg0, %c0_i32 : i32, i32
  }
  func.func @transform_1(%arg0: i32) -> (i32, i32) {
    %c0_i32 = arith.constant 0 : i32
    %c0_i32_0 = arith.constant 0 : i32
    %c0_i32_1 = arith.constant 0 : i32
    return %c0_i32, %c0_i32_0 : i32, i32
  }
  func.func @transform_2(%arg0: i32) -> (i32, i32) {
    %c0_i32 = arith.constant 0 : i32
    %c0_i32_0 = arith.constant 0 : i32
    %c0_i32_1 = arith.constant 0 : i32
    return %c0_i32, %c0_i32_0 : i32, i32
  }
  func.func @transform_3(%arg0: i32) -> (i32, i32) {
    %c0_i32 = arith.constant 0 : i32
    %c0_i32_0 = arith.constant 0 : i32
    %c0_i32_1 = arith.constant 0 : i32
    return %c0_i32, %c0_i32_0 : i32, i32
  }
  func.func @transform_4(%arg0: i32) -> (i32, i32) {
    %c0_i32 = arith.constant 0 : i32
    %c0_i32_0 = arith.constant 0 : i32
    %c0_i32_1 = arith.constant 0 : i32
    return %c0_i32, %c0_i32_0 : i32, i32
  }
  func.func @transform_5(%arg0: i32) -> (i32, i32) {
    %c0_i32 = arith.constant 0 : i32
    %c0_i32_0 = arith.constant 0 : i32
    %c0_i32_1 = arith.constant 0 : i32
    return %c0_i32, %c0_i32_0 : i32, i32
  }
  func.func @transform_6(%arg0: i32) -> (i32, i32) {
    %c0_i32 = arith.constant 0 : i32
    %c0_i32_0 = arith.constant 0 : i32
    %c0_i32_1 = arith.constant 0 : i32
    return %c0_i32, %c0_i32_0 : i32, i32
  }
  func.func @transform_7(%arg0: i32) -> (i32, i32) {
    %c0_i32 = arith.constant 0 : i32
    %c0_i32_0 = arith.constant 0 : i32
    return %arg0, %c0_i32 : i32, i32
  }
}

</mosaic_0001>

<llo_original>
// kernel: tpu_custom_call.1
$region0: #{tpu_custom_call.1}
  #allocation0 [shape = 'u32[]', space=smem, size = 0x4, offset = 0x4, fixed_abs, tag = 'smem constant byte address 0x4 - core index']
  #allocation1 [shape = 'u32[72,128]{1,0:T(1,128)}', space=vmem, size = 0x9000, scoped, tag = 'internal scratch']
  %s0 = inlined_call_operand.hbm [shape: f32[8,128], index: 0, kind: input, shape index: {}]
  %s1 = inlined_call_operand.hbm [shape: f32[128,128], index: 1, kind: input, shape index: {}]
  %s2 = inlined_call_operand.vmem [shape: f32[1,128], index: 2, kind: input, shape index: {}]
  %s3 = inlined_call_operand.hbm [shape: f32[128,128], index: 3, kind: input, shape index: {}]
  %s4 = inlined_call_operand.vmem [shape: f32[1,128], index: 4, kind: input, shape index: {}]
  %s5 = inlined_call_operand.hbm [shape: f32[128,128], index: 5, kind: input, shape index: {}]
  %s6 = inlined_call_operand.vmem [shape: f32[1,128], index: 6, kind: input, shape index: {}]
  %s7 = inlined_call_operand.hbm [shape: f32[8,128], index: 7, kind: output, shape index: {}]
  %s8 = sld [smem:[#allocation0]]
  $region54: #{tpu_custom_call.1} parent=0
    _
  %s10 = ssub.s32 1, %s8
  %s11 = scalar_select 0, %s10, %s8
  $region1: #{tpu_custom_call.1} parent=0
    #allocation2 [shape = 'u8[4096]{0}', space=vmem, size = 0x1000, scoped, tag = 'input window, operand 0, single buffered']
    #allocation3 [shape = 's32[1]{0}', space=sflag, size = 0x4, scoped, tag = 'scoped memory for tpu_custom_call.1']
    #allocation4 [shape = 's32[1]{0}', space=sflag, size = 0x4, scoped, tag = 'scoped memory for tpu_custom_call.1']
    #allocation5 [shape = 'u8[65536]{0}', space=vmem, size = 0x10000, scoped, tag = 'input window, operand 1, single buffered']
    #allocation6 [shape = 's32[1]{0}', space=sflag, size = 0x4, scoped, tag = 'scoped memory for tpu_custom_call.1']
    #allocation7 [shape = 'u8[65536]{0}', space=vmem, size = 0x10000, scoped, tag = 'input window, operand 3, single buffered']
    #allocation8 [shape = 'u8[65536]{0}', space=vmem, size = 0x10000, scoped, tag = 'input window, operand 5, single buffered']
    #allocation9 [shape = 's32[1]{0}', space=sflag, size = 0x4, scoped, tag = 'scoped memory for tpu_custom_call.1']
    #allocation10 [shape = 'u8[4096]{0}', space=vmem, size = 0x1000, scoped, tag = 'output window, operand 0, single buffered']
    %12 = vsyncpa [#allocation3], 0
    %13 = vsyncpa [#allocation6], 0
    %14 = vsyncpa [#allocation9], 0
    %15 = vsyncpa [#allocation4], 0
    // Predicated region
    $region2: #{tpu_custom_call.1} parent=1 // pred_check
      _
    $region3: #{tpu_custom_call.1} parent=1 // pred_check_branch
      %17 = sbr.rel (0) target = $region5
    $region4: #{tpu_custom_call.1} parent=1 // pred_region
      %19 = vsyncadd [#allocation3], 0
      %s21 = sshll.u32 %s0, 4
      %s22 = int_to_ptr.hbm [resolvable:$true] %s21
      %s23 = sshll.u32 [#allocation2], 4
      %s24 = int_to_ptr.vmem [resolvable:$true] %s23
      %26 = dma.hbm_to_vmem [thread:$0]  %s22, 128, %s24, [#allocation3]
    $region5: #{tpu_custom_call.1} parent=1 // pred_fallthru
      _
    // Predicated region
    $region6: #{tpu_custom_call.1} parent=1 // pred_check
      _
    $region7: #{tpu_custom_call.1} parent=1 // pred_check_branch
      %28 = sbr.rel (0) target = $region9
    $region8: #{tpu_custom_call.1} parent=1 // pred_region
      %30 = vsyncadd [#allocation6], 0
      %s31 = sshll.u32 %s1, 4
      %s32 = int_to_ptr.hbm [resolvable:$true] %s31
      %s33 = sshll.u32 [#allocation5], 4
      %s34 = int_to_ptr.vmem [resolvable:$true] %s33
      %39 = dma.hbm_to_vmem [thread:$0]  %s32, 2048, %s34, [#allocation6], 128, 128, 8
    $region9: #{tpu_custom_call.1} parent=1 // pred_fallthru
      _
    // Predicated region
    $region10: #{tpu_custom_call.1} parent=1 // pred_check
      _
    $region11: #{tpu_custom_call.1} parent=1 // pred_check_branch
      %41 = sbr.rel (0) target = $region13
    $region12: #{tpu_custom_call.1} parent=1 // pred_region
      _
    $region13: #{tpu_custom_call.1} parent=1 // pred_fallthru
      _
    // Predicated region
    $region14: #{tpu_custom_call.1} parent=1 // pred_check
      _
    $region15: #{tpu_custom_call.1} parent=1 // pred_check_branch
      %43 = sbr.rel (0) target = $region17
    $region16: #{tpu_custom_call.1} parent=1 // pred_region
      %45 = vsyncadd [#allocation6], 0
      %s46 = sshll.u32 %s3, 4
      %s47 = int_to_ptr.hbm [resolvable:$true] %s46
      %s48 = sshll.u32 [#allocation7], 4
      %s49 = int_to_ptr.vmem [resolvable:$true] %s48
      %54 = dma.hbm_to_vmem [thread:$0]  %s47, 2048, %s49, [#allocation6], 128, 128, 8
    $region17: #{tpu_custom_call.1} parent=1 // pred_fallthru
      _
    // Predicated region
    $region18: #{tpu_custom_call.1} parent=1 // pred_check
      _
    $region19: #{tpu_custom_call.1} parent=1 // pred_check_branch
      %56 = sbr.rel (0) target = $region21
    $region20: #{tpu_custom_call.1} parent=1 // pred_region
      _
    $region21: #{tpu_custom_call.1} parent=1 // pred_fallthru
      _
    // Predicated region
    $region22: #{tpu_custom_call.1} parent=1 // pred_check
      _
    $region23: #{tpu_custom_call.1} parent=1 // pred_check_branch
      %58 = sbr.rel (0) target = $region25
    $region24: #{tpu_custom_call.1} parent=1 // pred_region
      %60 = vsyncadd [#allocation9], 0
      %s61 = sshll.u32 %s5, 4
      %s62 = int_to_ptr.hbm [resolvable:$true] %s61
      %s63 = sshll.u32 [#allocation8], 4
      %s64 = int_to_ptr.vmem [resolvable:$true] %s63
      %69 = dma.hbm_to_vmem [thread:$0]  %s62, 2048, %s64, [#allocation9], 128, 128, 8
    $region25: #{tpu_custom_call.1} parent=1 // pred_fallthru
      _
    // Predicated region
    $region26: #{tpu_custom_call.1} parent=1 // pred_check
      _
    $region27: #{tpu_custom_call.1} parent=1 // pred_check_branch
      %71 = sbr.rel (0) target = $region29
    $region28: #{tpu_custom_call.1} parent=1 // pred_region
      _
    $region29: #{tpu_custom_call.1} parent=1 // pred_fallthru
      _
    // Predicated region
    $region30: #{tpu_custom_call.1} parent=1 // pred_check
      _
    $region31: #{tpu_custom_call.1} parent=1 // pred_check_branch
      %73 = sbr.rel (0) target = $region33
    $region32: #{tpu_custom_call.1} parent=1 // pred_region
      %75 = dma.done [#allocation3], 128
    $region33: #{tpu_custom_call.1} parent=1 // pred_fallthru
      _
    // Predicated region
    $region34: #{tpu_custom_call.1} parent=1 // pred_check
      _
    $region35: #{tpu_custom_call.1} parent=1 // pred_check_branch
      %77 = sbr.rel (0) target = $region37
    $region36: #{tpu_custom_call.1} parent=1 // pred_region
      %79 = dma.done [#allocation6], 2048
    $region37: #{tpu_custom_call.1} parent=1 // pred_fallthru
      _
    // Predicated region
    $region38: #{tpu_custom_call.1} parent=1 // pred_check
      _
    $region39: #{tpu_custom_call.1} parent=1 // pred_check_branch
      %81 = sbr.rel (0) target = $region41
    $region40: #{tpu_custom_call.1} parent=1 // pred_region
      %83 = dma.done [#allocation6], 2048
    $region41: #{tpu_custom_call.1} parent=1 // pred_fallthru
      _
    // Predicated region
    $region42: #{tpu_custom_call.1} parent=1 // pred_check
      _
    $region43: #{tpu_custom_call.1} parent=1 // pred_check_branch
      %85 = sbr.rel (0) target = $region45
    $region44: #{tpu_custom_call.1} parent=1 // pred_region
      %87 = dma.done [#allocation9], 2048
    $region45: #{tpu_custom_call.1} parent=1 // pred_fallthru
      _
    %v88 = vld [vmem:[#allocation2] sm:$0xff]
    %v89 = vld [vmem:[#allocation5] sm:$0xff]
    %v90 = vld [vmem:[#allocation5 + $0x8] sm:$0xff]
    %v91 = vld [vmem:[#allocation5 + $0x10] sm:$0xff]
    %v92 = vld [vmem:[#allocation5 + $0x18] sm:$0xff]
    %v93 = vld [vmem:[#allocation5 + $0x20] sm:$0xff]
    %v94 = vld [vmem:[#allocation5 + $0x28] sm:$0xff]
    %v95 = vld [vmem:[#allocation5 + $0x30] sm:$0xff]
    %v96 = vld [vmem:[#allocation5 + $0x38] sm:$0xff]
    %v97 = vld [vmem:[#allocation5 + $0x40] sm:$0xff]
    %v98 = vld [vmem:[#allocation5 + $0x48] sm:$0xff]
    %v99 = vld [vmem:[#allocation5 + $0x50] sm:$0xff]
    %v100 = vld [vmem:[#allocation5 + $0x58] sm:$0xff]
    %v101 = vld [vmem:[#allocation5 + $0x60] sm:$0xff]
    %v102 = vld [vmem:[#allocation5 + $0x68] sm:$0xff]
    %v103 = vld [vmem:[#allocation5 + $0x70] sm:$0xff]
    %v104 = vld [vmem:[#allocation5 + $0x78] sm:$0xff]
    %v105 = vld [vmem:[%s2] sm:$0x1]
    %v107 = vperm.slane %v105, 0
    %109 = vmatpush.msra.mxu0 %v104
    %110 = vmatpush.msra.mxu0 %v103
    %111 = vmatpush.msra.mxu0 %v102
    %112 = vmatpush.msra.mxu0 %v101
    %113 = vmatpush.msra.mxu0 %v100
    %114 = vmatpush.msra.mxu0 %v99
    %115 = vmatpush.msra.mxu0 %v98
    %116 = vmatpush.msra.mxu0 %v97
    %117 = vmatpush.msra.mxu0 %v96
    %118 = vmatpush.msra.mxu0 %v95
    %119 = vmatpush.msra.mxu0 %v94
    %120 = vmatpush.msra.mxu0 %v93
    %121 = vmatpush.msra.mxu0 %v92
    %122 = vmatpush.msra.mxu0 %v91
    %123 = vmatpush.msra.mxu0 %v90
    %124 = vmatpush.msra.mxu0 %v89
    %125 = vmatmul.f32.gmra.mxu0 %v88
    %v126 = vpop.f32.mrf.mxu0
    %v127 = vadd.f32 %v107, %v126
    %128 = vdwg.mxu0
    %v129 = vmax.f32 %v127, 0.0
    %v130 = vld [vmem:[#allocation7] sm:$0xff]
    %v131 = vld [vmem:[#allocation7 + $0x8] sm:$0xff]
    %v132 = vld [vmem:[#allocation7 + $0x10] sm:$0xff]
    %v133 = vld [vmem:[#allocation7 + $0x18] sm:$0xff]
    %v134 = vld [vmem:[#allocation7 + $0x20] sm:$0xff]
    %v135 = vld [vmem:[#allocation7 + $0x28] sm:$0xff]
    %v136 = vld [vmem:[#allocation7 + $0x30] sm:$0xff]
    %v137 = vld [vmem:[#allocation7 + $0x38] sm:$0xff]
    %v138 = vld [vmem:[#allocation7 + $0x40] sm:$0xff]
    %v139 = vld [vmem:[#allocation7 + $0x48] sm:$0xff]
    %v140 = vld [vmem:[#allocation7 + $0x50] sm:$0xff]
    %v141 = vld [vmem:[#allocation7 + $0x58] sm:$0xff]
    %v142 = vld [vmem:[#allocation7 + $0x60] sm:$0xff]
    %v143 = vld [vmem:[#allocation7 + $0x68] sm:$0xff]
    %v144 = vld [vmem:[#allocation7 + $0x70] sm:$0xff]
    %v145 = vld [vmem:[#allocation7 + $0x78] sm:$0xff]
    %v146 = vld [vmem:[%s4] sm:$0x1]
    %v148 = vperm.slane %v146, 0
    %150 = vmatpush.msra.mxu0 %v145
    %151 = vmatpush.msra.mxu0 %v144
    %152 = vmatpush.msra.mxu0 %v143
    %153 = vmatpush.msra.mxu0 %v142
    %154 = vmatpush.msra.mxu0 %v141
    %155 = vmatpush.msra.mxu0 %v140
    %156 = vmatpush.msra.mxu0 %v139
    %157 = vmatpush.msra.mxu0 %v138
    %158 = vmatpush.msra.mxu0 %v137
    %159 = vmatpush.msra.mxu0 %v136
    %160 = vmatpush.msra.mxu0 %v135
    %161 = vmatpush.msra.mxu0 %v134
    %162 = vmatpush.msra.mxu0 %v133
    %163 = vmatpush.msra.mxu0 %v132
    %164 = vmatpush.msra.mxu0 %v131
    %165 = vmatpush.msra.mxu0 %v130
    %166 = vmatmul.f32.gmra.mxu0 %v129
    %v167 = vpop.f32.mrf.mxu0
    %v168 = vadd.f32 %v148, %v167
    %169 = vdwg.mxu0
    %v170 = vmax.f32 %v168, 0.0
    %v171 = vld [vmem:[#allocation8] sm:$0xff]
    %v172 = vld [vmem:[#allocation8 + $0x8] sm:$0xff]
    %v173 = vld [vmem:[#allocation8 + $0x10] sm:$0xff]
    %v174 = vld [vmem:[#allocation8 + $0x18] sm:$0xff]
    %v175 = vld [vmem:[#allocation8 + $0x20] sm:$0xff]
    %v176 = vld [vmem:[#allocation8 + $0x28] sm:$0xff]
    %v177 = vld [vmem:[#allocation8 + $0x30] sm:$0xff]
    %v178 = vld [vmem:[#allocation8 + $0x38] sm:$0xff]
    %v179 = vld [vmem:[#allocation8 + $0x40] sm:$0xff]
    %v180 = vld [vmem:[#allocation8 + $0x48] sm:$0xff]
    %v181 = vld [vmem:[#allocation8 + $0x50] sm:$0xff]
    %v182 = vld [vmem:[#allocation8 + $0x58] sm:$0xff]
    %v183 = vld [vmem:[#allocation8 + $0x60] sm:$0xff]
    %v184 = vld [vmem:[#allocation8 + $0x68] sm:$0xff]
    %v185 = vld [vmem:[#allocation8 + $0x70] sm:$0xff]
    %v186 = vld [vmem:[#allocation8 + $0x78] sm:$0xff]
    %v187 = vld [vmem:[%s6] sm:$0x1]
    %v189 = vperm.slane %v187, 0
    %191 = vmatpush.msra.mxu0 %v186
    %192 = vmatpush.msra.mxu0 %v185
    %193 = vmatpush.msra.mxu0 %v184
    %194 = vmatpush.msra.mxu0 %v183
    %195 = vmatpush.msra.mxu0 %v182
    %196 = vmatpush.msra.mxu0 %v181
    %197 = vmatpush.msra.mxu0 %v180
    %198 = vmatpush.msra.mxu0 %v179
    %199 = vmatpush.msra.mxu0 %v178
    %200 = vmatpush.msra.mxu0 %v177
    %201 = vmatpush.msra.mxu0 %v176
    %202 = vmatpush.msra.mxu0 %v175
    %203 = vmatpush.msra.mxu0 %v174
    %204 = vmatpush.msra.mxu0 %v173
    %205 = vmatpush.msra.mxu0 %v172
    %206 = vmatpush.msra.mxu0 %v171
    %207 = vmatmul.f32.gmra.mxu0 %v170
    %v208 = vpop.f32.mrf.mxu0
    %v209 = vadd.f32 %v189, %v208
    %210 = vdwg.mxu0
    %211 = vst [vmem:[#allocation10] sm:$0xff] %v209
    // Predicated region
    $region46: #{tpu_custom_call.1} parent=1 // pred_check
      _
    $region47: #{tpu_custom_call.1} parent=1 // pred_check_branch
      %213 = sbr.rel (0) target = $region49
    $region48: #{tpu_custom_call.1} parent=1 // pred_region
      %215 = vsyncadd [#allocation4], 0
      %s217 = sshll.u32 [#allocation10], 4
      %s218 = int_to_ptr.vmem [resolvable:$true] %s217
      %s219 = sshll.u32 %s7, 4
      %s220 = int_to_ptr.hbm [resolvable:$true] %s219
      %222 = dma.vmem_to_hbm [thread:$0]  %s218, 128, %s220, [#allocation4]
    $region49: #{tpu_custom_call.1} parent=1 // pred_fallthru
      _
    // Predicated region
    $region50: #{tpu_custom_call.1} parent=1 // pred_check
      _
    $region51: #{tpu_custom_call.1} parent=1 // pred_check_branch
      %224 = sbr.rel (0) target = $region53
    $region52: #{tpu_custom_call.1} parent=1 // pred_region
      %226 = dma.done [#allocation4], 128
    $region53: #{tpu_custom_call.1} parent=1 // pred_fallthru
      _
    %227 = vsyncpa [#allocation3], 1
    %228 = vsyncpa [#allocation6], 1
    %229 = vsyncpa [#allocation9], 1
    %230 = vsyncpa [#allocation4], 1

</llo_original>
